<compile_context>
chip_gen: v5e
topology: v5e:2x2
jax: 0.10.0
libtpu: 0.0.40
codegen_flags: <defaults>
</compile_context>

<pallas_src>
import jax
import jax.numpy as jnp
from jax.experimental import pallas as pl
from jax.experimental.pallas import tpu as pltpu

_SMALL_N_BYPASS = 65536          # below this, fused XLA beats kernel-launch overhead
_NARROW_TILE_BYTES = 3 << 20     # per full-size stream (y/out): 2 streams x 2 bufs = 12 MiB
_FALLBACK_TILE_BYTES = 1 << 20   # 5 streams x 2 bufs = 10 MiB
_VMEM_LIMIT_BYTES = 32 * 1024 * 1024


def _coeff_kernel(coeff_ref, y_ref, o_ref):
    # coeff_ref: (tile_r, 1) f32 column (minus sign already folded in);
    # y_ref/o_ref: (tile_r, W).  The lane broadcast of the column is a cheap VPU op.
    o_ref[...] = (coeff_ref[...] * y_ref[...].astype(jnp.float32)).astype(o_ref.dtype)


def _full_kernel(t_ref, a_ref, b_ref, c_ref, y_ref, o_ref):
    # Fallback: all operands are full-size tiles; coeff math in f32, cast on store.
    t = t_ref[0]
    coeff = (a_ref[...].astype(jnp.float32) * t
             + b_ref[...].astype(jnp.float32)
             + c_ref[...].astype(jnp.float32))
    o_ref[...] = (-(coeff * y_ref[...].astype(jnp.float32))).astype(o_ref.dtype)


def _prod(dims):
    p = 1
    for d in dims:
        p *= d
    return p


def _pick_lane_width(inner):
    # `inner` is a positive multiple of 128 here.
    if inner <= 4096:
        return inner
    for w in (4096, 2048, 1024, 512, 256, 128):
        if inner % w == 0:
            return w
    return 128


def _pick_tile_rows(rows, width, itemsize, target_bytes):
    target_rows = max(1, target_bytes // (width * itemsize))
    if rows > 16:
        # keep >= 2 row blocks so the "parallel" axis can shard across v7x's
        # two TensorCores (free when HBM-bound, a win on smaller sizes)
        target_rows = min(target_rows, -(-rows // 2))
    if rows <= target_rows:
        return rows
    return max(8, (target_rows // 8) * 8)


def _row_block_spec(tile_r, width):
    return pl.BlockSpec((tile_r, width), lambda i: (i, 0))


def _compiler_params():
    return pltpu.CompilerParams(
        dimension_semantics=("parallel",),
        vmem_limit_bytes=_VMEM_LIMIT_BYTES,
    )


def ivp_forward(t, y, c, a, b):
    """Computes -a*y*t - b*y - c*y elementwise (IVPNNModule.forward)."""
    t = jnp.asarray(t)
    y = jnp.asarray(y)
    c = jnp.asarray(c)
    a = jnp.asarray(a)
    b = jnp.asarray(b)

    if t.size != 1:
        # TODO(synk): non-scalar t (broadcast over y) not implemented; solve_ivp
        # only ever evaluates the RHS at a single scalar time point.
        raise NotImplementedError("ivp_forward expects a scalar t")

    out_dtype = jnp.result_type(a.dtype, b.dtype, c.dtype, y.dtype)
    out_shape = jnp.broadcast_shapes(y.shape, c.shape, a.shape, b.shape)
    n = _prod(out_shape)
    if n == 0:
        return jnp.zeros(out_shape, out_dtype)

    t32 = t.astype(jnp.float32).reshape(())

    # --- small-problem bypass: launch + per-step overhead dwarfs 3 VPU ops at
    # ODE-solver-sized states, so just emit the fused XLA expression.
    if n < _SMALL_N_BYPASS:
        coeff = -(a.astype(jnp.float32) * t32
                  + b.astype(jnp.float32)
                  + c.astype(jnp.float32))
        return (coeff * y.astype(jnp.float32)).astype(out_dtype)

    # Broadcast structure of coeff = -(a*t + b + c): find the largest trailing
    # chunk of out_shape over which coeff is constant.
    coeff_shape = jnp.broadcast_shapes(a.shape, b.shape, c.shape)
    ndim = len(out_shape)
    coeff_padded = (1,) * (ndim - len(coeff_shape)) + tuple(coeff_shape)
    split = ndim
    while split > 0 and coeff_padded[split - 1] == 1:
        split -= 1
    inner = _prod(out_shape[split:])
    outer = n // inner

    itemsize = max(jnp.dtype(out_dtype).itemsize, jnp.dtype(y.dtype).itemsize)

    if inner % 128 == 0:
        # --- narrow-coeff path: only y and out are streamed full-size; a/b/c
        # collapse to a tiny per-row f32 column (<= N/128 elements) built by XLA.
        coeff = -(a.astype(jnp.float32) * t32
                  + b.astype(jnp.float32)
                  + c.astype(jnp.float32))
        lead_shape = tuple(out_shape[:split]) + (1,) * (ndim - split)
        coeff_flat = jnp.broadcast_to(coeff.reshape(coeff_padded),
                                      lead_shape).reshape(outer)

        width = _pick_lane_width(inner)
        reps = inner // width
        rows = outer * reps
        coeff_col = jnp.broadcast_to(
            coeff_flat.reshape(outer, 1, 1), (outer, reps, 1)).reshape(rows, 1)
        y_slab = jnp.broadcast_to(y, out_shape).reshape(rows, width)

        tile_r = _pick_tile_rows(rows, width, itemsize, _NARROW_TILE_BYTES)
        num_blocks = pl.cdiv(rows, tile_r)

        out2d = pl.pallas_call(
            _coeff_kernel,
            out_shape=jax.ShapeDtypeStruct((rows, width), out_dtype),
            grid=(num_blocks,),
            in_specs=[
                pl.BlockSpec((tile_r, 1), lambda i: (i, 0)),   # coeff column
                _row_block_spec(tile_r, width),                # y
            ],
            out_specs=_row_block_spec(tile_r, width),
            compiler_params=_compiler_params(),
        )(coeff_col, y_slab)
        return out2d.reshape(out_shape)

    # --- fallback: coeff varies along the lane axis (a/b/c effectively full
    # size), so stream all four operands.  broadcast_to is a no-op in the
    # common case; padding happens only when n has no divisor in {1024..128}.
    def _flat(x):
        return jnp.broadcast_to(x, out_shape).reshape(-1)

    width = 0
    for w in (1024, 512, 256, 128):
        if n % w == 0:
            width = w
            break
    pad = 0
    if width == 0:
        width = 512
        pad = (-n) % width

    def _slab(x):
        fx = _flat(x)
        if pad:
            fx = jnp.pad(fx, (0, pad))
        return fx.reshape((n + pad) // width, width)

    a2d, b2d, c2d, y2d = _slab(a), _slab(b), _slab(c), _slab(y)
    rows = (n + pad) // width
    tile_r = _pick_tile_rows(rows, width, itemsize, _FALLBACK_TILE_BYTES)
    num_blocks = pl.cdiv(rows, tile_r)
    t_arr = t32.reshape(1)                     # f32 scalar in SMEM

    tile_spec = _row_block_spec(tile_r, width)
    out2d = pl.pallas_call(
        _full_kernel,
        out_shape=jax.ShapeDtypeStruct((rows, width), out_dtype),
        grid=(num_blocks,),
        in_specs=[
            pl.BlockSpec(memory_space=pltpu.SMEM),   # scalar t
            tile_spec, tile_spec, tile_spec, tile_spec,
        ],
        out_specs=tile_spec,
        compiler_params=_compiler_params(),
    )(t_arr, a2d, b2d, c2d, y2d)

    out_flat = out2d.reshape(-1)
    if pad:
        out_flat = out_flat[:n]
    return out_flat.reshape(out_shape)


def _reference(t, y, c, a, b):
    return -a * y * t - b * y - c * y


if __name__ == "__main__":
    key = jax.random.PRNGKey(0)
    k1, k2, k3, k4 = jax.random.split(key, 4)

    # Small IVP-style shapes (structure of the xitorch test): state y is
    # (nr, hidden), per-row coefficients a/b (module params) and c are (nr, 1),
    # t is a scalar time point.  This hits the fused small-problem bypass.
    nr, hidden = 8, 32
    y = jax.random.normal(k1, (nr, hidden), dtype=jnp.float32)
    c = jax.random.normal(k2, (nr, 1), dtype=jnp.float32)
    a = jax.random.uniform(k3, (nr, 1), dtype=jnp.float32)   # module param
    b = jax.random.normal(k4, (nr, 1), dtype=jnp.float32)    # module param
    t = jnp.float32(0.25)

    out = jax.block_until_ready(ivp_forward(t, y, c, a, b))
    ref = _reference(t, y, c, a, b)
    assert out.shape == ref.shape
    assert jnp.allclose(out, ref, atol=1e-5, rtol=1e-5), "bypass-path mismatch"

    # Narrow-coeff Pallas path: full-size y, narrow (rows,1) coefficients,
    # partial edge row block and a multi-block "parallel" grid.
    k5, k6, k7, k8 = jax.random.split(jax.random.PRNGKey(1), 4)
    y2 = jax.random.normal(k5, (250, 1024), dtype=jnp.float32)
    c2 = jax.random.normal(k6, (250, 1), dtype=jnp.float32)
    a2 = jax.random.uniform(k7, (250, 1), dtype=jnp.float32)
    b2 = jax.random.normal(k8, (250, 1), dtype=jnp.float32)
    out2 = jax.block_until_ready(ivp_forward(t, y2, c2, a2, b2))
    ref2 = _reference(t, y2, c2, a2, b2)
    assert jnp.allclose(out2, ref2, atol=1e-5, rtol=1e-5), "narrow-path mismatch"

    # Fallback Pallas path: a/b/c are full-size (no trailing broadcast) and the
    # odd element count exercises the pad-to-lane-dense route.
    k9, k10, k11, k12 = jax.random.split(jax.random.PRNGKey(2), 4)
    shape3 = (130, 513)
    y3 = jax.random.normal(k9, shape3, dtype=jnp.float32)
    c3 = jax.random.normal(k10, shape3, dtype=jnp.float32)
    a3 = jax.random.uniform(k11, shape3, dtype=jnp.float32)
    b3 = jax.random.normal(k12, shape3, dtype=jnp.float32)
    out3 = jax.block_until_ready(ivp_forward(t, y3, c3, a3, b3))
    ref3 = _reference(t, y3, c3, a3, b3)
    assert jnp.allclose(out3, ref3, atol=1e-5, rtol=1e-5), "fallback-path mismatch"

    print("KERNEL_OK")
</pallas_src>

<mosaic_0001>
module attributes {stable_mosaic.version = 11 : i64} {
  func.func @_coeff_kernel(%arg0: i32, %arg1: memref<120x1xf32, #tpu.memory_space<vmem>>, %arg2: memref<120x1024xf32, #tpu.memory_space<vmem>>, %arg3: memref<120x1024xf32, #tpu.memory_space<vmem>>) attributes {dimension_semantics = [#tpu.dimension_semantics<parallel>], iteration_bounds = array<i64: 3>, scalar_prefetch = 0 : i64, scratch_operands = 0 : i64, tpu.core_type = #tpu.core_type<tc>, window_params = [{transform_indices = @transform_0, window_bounds = array<i64: 120, 1>}, {transform_indices = @transform_1, window_bounds = array<i64: 120, 1024>}, {transform_indices = @transform_2, window_bounds = array<i64: 120, 1024>}]} {
    %c0 = arith.constant 0 : index
    %c0_0 = arith.constant 0 : index
    %0 = vector.load %arg1[%c0, %c0_0] : memref<120x1xf32, #tpu.memory_space<vmem>>, vector<120x1xf32>
    %c0_1 = arith.constant 0 : index
    %c0_2 = arith.constant 0 : index
    %1 = vector.load %arg2[%c0_1, %c0_2] : memref<120x1024xf32, #tpu.memory_space<vmem>>, vector<120x1024xf32>
    %2 = vector.broadcast %0 : vector<120x1xf32> to vector<120x1024xf32>
    %3 = arith.mulf %2, %1 : vector<120x1024xf32>
    %c0_3 = arith.constant 0 : index
    %c0_4 = arith.constant 0 : index
    %4 = vector.load %arg3[%c0_3, %c0_4] : memref<120x1024xf32, #tpu.memory_space<vmem>>, vector<120x1024xf32>
    tpu.vector_store %arg3[%c0_3, %c0_4], %3 {strides = array<i32>} : memref<120x1024xf32, #tpu.memory_space<vmem>>, vector<120x1024xf32>,
    return
  }
  func.func @transform_0(%arg0: i32) -> (i32, i32) {
    %c0_i32 = arith.constant 0 : i32
    %c0_i32_0 = arith.constant 0 : i32
    return %arg0, %c0_i32 : i32, i32
  }
  func.func @transform_1(%arg0: i32) -> (i32, i32) {
    %c0_i32 = arith.constant 0 : i32
    %c0_i32_0 = arith.constant 0 : i32
    return %arg0, %c0_i32 : i32, i32
  }
  func.func @transform_2(%arg0: i32) -> (i32, i32) {
    %c0_i32 = arith.constant 0 : i32
    %c0_i32_0 = arith.constant 0 : i32
    return %arg0, %c0_i32 : i32, i32
  }
}

</mosaic_0001>

<llo_original>
// kernel: tpu_custom_call.1
$region0: #{tpu_custom_call.1}
  #allocation0 [shape = 'u32[]', space=smem, size = 0x4, offset = 0x4, fixed_abs, tag = 'smem constant byte address 0x4 - core index']
  #allocation1 [shape = 'u32[72,128]{1,0:T(1,128)}', space=vmem, size = 0x9000, scoped, tag = 'internal scratch']
  %s0 = inlined_call_operand.vmem [shape: f32[250,1], index: 0, kind: input, shape index: {}]
  %s1 = inlined_call_operand.hbm [shape: f32[250,1024], index: 1, kind: input, shape index: {}]
  %s2 = inlined_call_operand.hbm [shape: f32[250,1024], index: 2, kind: output, shape index: {}]
  %s3 = sld [smem:[#allocation0]]
  $region45: #{tpu_custom_call.1} parent=0
    _
  %s5 = ssub.s32 1, %s3
  %s6 = scalar_select 0, %s5, %s3
  $region1: #{tpu_custom_call.1} parent=0
    #allocation2 [shape = 'u8[983040]{0}', space=vmem, size = 0xf0000, scoped, tag = 'input window, operand 1']
    #allocation3 [shape = 's32[2]{0}', space=sflag, size = 0x8, scoped, tag = 'scoped memory for tpu_custom_call.1']
    #allocation4 [shape = 's32[2]{0}', space=sflag, size = 0x8, scoped, tag = 'scoped memory for tpu_custom_call.1']
    #allocation5 [shape = 'u8[983040]{0}', space=vmem, size = 0xf0000, scoped, tag = 'output window, operand 0']
    %7 = vsyncpa [#allocation3], 0
    %s8 = scalar_lea.sflag [#allocation3], 1
    %9 = vsyncpa %s8, 0
    %10 = vsyncpa [#allocation4], 0
    %s11 = scalar_lea.sflag [#allocation4], 1
    %12 = vsyncpa %s11, 0
    loop: start=0, step=1, limit=5
    $region2: #{tpu_custom_call.1} parent=1 // loop_pre_header
      _
    $region3: #{tpu_custom_call.1} parent=1 // loop_header
      %s14 = sphi 0, %s18
      %p15 = scmp.ge.s32.totalorder %s14, 5
      %s24 = sphi 0, %s26
      %s27 = sphi 0, %s24
      %s28 = sphi 0, %s27
      %s44 = sphi 0, %s28
      %s50 = sphi 0, %s52
      %s53 = sphi 0, %s50
      %s54 = sphi 0, %s53
      %s70 = sphi 0, %s54
      %s76 = sphi 0, %s78
      %s79 = sphi 0, %s76
      %s80 = sphi 0, %s79
      %s96 = sphi 0, %s80
    $region4: #{tpu_custom_call.1} parent=1 // loop_header_branch
      %17 = sbr.rel (%p15) target = $region8
    $region5: #{tpu_custom_call.1} parent=1 // loop_body
      %s19 = ssub.s32 %s14, 1
      %s20 = ssub.s32 %s14, 2
      %s21 = sadd.s32 %s14, 1
      %s22 = ssub.s32 %s14, %s21
      %p23 = scmp.eq.s32.totalorder %s22, 0
      %s25 = sadd.s32 %s24, 1
      %s26 = scalar_select %p23, %s24, %s25
      %p29 = pneg %p23
      %p30 = scmp.eq.s32.totalorder %s14, 2
      %p31 = por %p29, %p30
      %p32 = scmp.ne.s32.totalorder %s24, %s27
      %p33 = scmp.eq.s32.totalorder %s14, 0
      %p34 = por %p32, %p33
      %p35 = scmp.ne.s32.totalorder %s24, %s27
      %p36 = scmp.eq.s32.totalorder %s19, 2
      %p37 = por %p35, %p36
      %p38 = scmp.ne.s32.totalorder %s27, %s28
      %p39 = scmp.eq.s32.totalorder %s19, 0
      %p40 = por %p38, %p39
      %p41 = scmp.ne.s32.totalorder %s27, %s28
      %p42 = scmp.eq.s32.totalorder %s20, 2
      %p43 = por %p41, %p42
      %p45 = scmp.ne.s32.totalorder %s28, %s44
      %p46 = scmp.eq.s32.totalorder %s20, 0
      %p47 = por %p45, %p46
      %s48 = ssub.s32 %s14, %s21
      %p49 = scmp.eq.s32.totalorder %s48, 0
      %s51 = sadd.s32 %s50, 1
      %s52 = scalar_select %p49, %s50, %s51
      %p55 = pneg %p49
      %p56 = scmp.eq.s32.totalorder %s14, 2
      %p57 = por %p55, %p56
      %p58 = scmp.ne.s32.totalorder %s50, %s53
      %p59 = scmp.eq.s32.totalorder %s14, 0
      %p60 = por %p58, %p59
      %p61 = scmp.ne.s32.totalorder %s50, %s53
      %p62 = scmp.eq.s32.totalorder %s19, 2
      %p63 = por %p61, %p62
      %p64 = scmp.ne.s32.totalorder %s53, %s54
      %p65 = scmp.eq.s32.totalorder %s19, 0
      %p66 = por %p64, %p65
      %p67 = scmp.ne.s32.totalorder %s53, %s54
      %p68 = scmp.eq.s32.totalorder %s20, 2
      %p69 = por %p67, %p68
      %p71 = scmp.ne.s32.totalorder %s54, %s70
      %p72 = scmp.eq.s32.totalorder %s20, 0
      %p73 = por %p71, %p72
      %s74 = ssub.s32 %s14, %s21
      %p75 = scmp.eq.s32.totalorder %s74, 0
      %s77 = sadd.s32 %s76, 1
      %s78 = scalar_select %p75, %s76, %s77
      %p81 = pneg %p75
      %p82 = scmp.eq.s32.totalorder %s14, 2
      %p83 = por %p81, %p82
      %p84 = scmp.ne.s32.totalorder %s76, %s79
      %p85 = scmp.eq.s32.totalorder %s14, 0
      %p86 = por %p84, %p85
      %p87 = scmp.ne.s32.totalorder %s76, %s79
      %p88 = scmp.eq.s32.totalorder %s19, 2
      %p89 = por %p87, %p88
      %p90 = scmp.ne.s32.totalorder %s79, %s80
      %p91 = scmp.eq.s32.totalorder %s19, 0
      %p92 = por %p90, %p91
      %p93 = scmp.ne.s32.totalorder %s79, %s80
      %p94 = scmp.eq.s32.totalorder %s20, 2
      %p95 = por %p93, %p94
      %p97 = scmp.ne.s32.totalorder %s80, %s96
      %p98 = scmp.eq.s32.totalorder %s20, 0
      %p99 = por %p97, %p98
      %p100 = scmp.le.s32.totalorder 1, %s14
      %p101 = scmp.lt.s32.totalorder %s14, 4
      %p102 = pnand %p100, %p101
      %p103 = pneg %p102
      // Predicated region
      $region9: #{tpu_custom_call.1} parent=5 // pred_check
        _
      $region10: #{tpu_custom_call.1} parent=5 // pred_check_branch
        %105 = sbr.rel (%p102) target = $region12
      $region11: #{tpu_custom_call.1} parent=5 // pred_region
        %s106 = ssub.s32 %s14, 1
      $region12: #{tpu_custom_call.1} parent=5 // pred_fallthru
        _
      %p107 = scmp.lt.s32.totalorder %s14, 3
      // Predicated region
      $region13: #{tpu_custom_call.1} parent=5 // pred_check
        %p108 = pneg %p107
      $region14: #{tpu_custom_call.1} parent=5 // pred_check_branch
        %110 = sbr.rel (%p108) target = $region16
      $region15: #{tpu_custom_call.1} parent=5 // pred_region
        // Predicated region
        $region17: #{tpu_custom_call.1} parent=15 // pred_check
          %p111 = pneg %p34
        $region18: #{tpu_custom_call.1} parent=15 // pred_check_branch
          %113 = sbr.rel (%p111) target = $region20
        $region19: #{tpu_custom_call.1} parent=15 // pred_region
          %s114 = smul.u32 15, %s14
          %s115 = ssub.s32 32, %s114
          %p116 = scmp.lt.s32.totalorder %s115, 15
          %s117 = scalar_select %p116, %s115, 15
          %s118 = smul.u32 8, %s117
          %p119 = scmp.lt.s32.totalorder %s114, 31
          %s120 = scalar_select %p119, %s114, 31
          %s121 = smul.addr %s120, 8
          %s122 = scalar_lea.vmem %s0, %s121
          %s123 = smul.u32 15, %s14
          %s124 = ssub.s32 32, %s123
          %p125 = scmp.lt.s32.totalorder %s124, 15
          %s126 = scalar_select %p125, %s124, 15
          %s127 = smul.u32 8, %s126
        $region20: #{tpu_custom_call.1} parent=15 // pred_fallthru
          _
        // Predicated region
        $region21: #{tpu_custom_call.1} parent=15 // pred_check
          %p128 = pneg %p60
        $region22: #{tpu_custom_call.1} parent=15 // pred_check_branch
          %130 = sbr.rel (%p128) target = $region24
        $region23: #{tpu_custom_call.1} parent=15 // pred_region
          %s131 = sand.u32 %s50, 1
          %s132 = scalar_lea.sflag [#allocation3], %s131
          %s133 = sand.u32 %s50, 1
          %s134 = smul.addr %s133, 960
          %s135 = scalar_lea.vmem [#allocation2], %s134
          %s136 = smul.u32 15, %s14
          %s137 = ssub.s32 32, %s136
          %p138 = scmp.lt.s32.totalorder %s137, 15
          %s139 = scalar_select %p138, %s137, 15
          %s140 = smul.u32 8, %s139
          %s141 = smul.u32 %s140, 8
          %s142 = ssub.s32 960, %s141
          %s143 = sshll.u32 %s142, 4
          %144 = vsyncadd %s132, %s143
          %p145 = scmp.ne.s32.totalorder 0, %s141
          %s146 = smul.addr %s136, 8
          %s147 = smul.addr %s146, 8
          %s148 = scalar_lea.hbm %s1, %s147
          %s149 = smul.u32 64, %s139
          %s150 = sshll.u32 %s148, 4
          %s151 = int_to_ptr.hbm [resolvable:$true] %s150
          %s152 = sshll.u32 %s135, 4
          %s153 = int_to_ptr.vmem [resolvable:$true] %s152
          %s154 = sshll.u32 %s149, 4
          %158 = dma.hbm_to_vmem [thread:$0]  (%p145), %s151, %s154, %s153, %s132, 1024, 1024, 64
        $region24: #{tpu_custom_call.1} parent=15 // pred_fallthru
          _
      $region16: #{tpu_custom_call.1} parent=5 // pred_fallthru
        _
      %p159 = scmp.le.s32.totalorder 1, %s14
      %p160 = scmp.lt.s32.totalorder %s14, 4
      %p161 = pnand %p159, %p160
      %p162 = pneg %p161
      // Predicated region
      $region25: #{tpu_custom_call.1} parent=5 // pred_check
        _
      $region26: #{tpu_custom_call.1} parent=5 // pred_check_branch
        %164 = sbr.rel (%p161) target = $region28
      $region27: #{tpu_custom_call.1} parent=5 // pred_region
        %s165 = ssub.s32 %s14, 1
        %s166 = sand.u32 %s53, 1
        %s167 = scalar_lea.sflag [#allocation3], %s166
        %s168 = sand.u32 %s53, 1
        %s169 = smul.addr %s168, 960
        %s170 = scalar_lea.vmem [#allocation2], %s169
        // Predicated region
        $region29: #{tpu_custom_call.1} parent=27 // pred_check
          %p171 = pneg %p66
        $region30: #{tpu_custom_call.1} parent=27 // pred_check_branch
          %173 = sbr.rel (%p171) target = $region32
        $region31: #{tpu_custom_call.1} parent=27 // pred_region
          %175 = dma.done %s167, 15360
        $region32: #{tpu_custom_call.1} parent=27 // pred_fallthru
          _
        %s176 = smul.u32 15, %s19
        %s177 = ssub.s32 32, %s176
        %p178 = scmp.lt.s32.totalorder %s177, 15
        %s179 = scalar_select %p178, %s177, 15
        %s180 = smul.u32 8, %s179
        %p181 = scmp.lt.s32.totalorder %s176, 31
        %s182 = scalar_select %p181, %s176, 31
        %s183 = smul.addr %s182, 8
        %s184 = scalar_lea.vmem %s0, %s183
        %p185 = pneg %p40
        %p186 = pneg %p37
        %s187 = sand.u32 %s53, 1
        %s188 = scalar_lea.sflag [#allocation3], %s187
        %s189 = sand.u32 %s53, 1
        %s190 = smul.addr %s189, 960
        %s191 = scalar_lea.vmem [#allocation2], %s190
        %p192 = pneg %p66
        %p193 = pneg %p63
        %p194 = pneg %p92
        %p195 = pneg %p89
        %s196 = sand.u32 %s79, 1
        %s197 = scalar_lea.sflag [#allocation4], %s196
        %s198 = sand.u32 %s79, 1
        %s199 = smul.addr %s198, 960
        %s200 = scalar_lea.vmem [#allocation5], %s199
        %s201 = smul.u32 15, %s19
        %s202 = ssub.s32 32, %s201
        %p203 = scmp.lt.s32.totalorder %s202, 15
        %s204 = scalar_select %p203, %s202, 15
        %s205 = smul.u32 8, %s204
        %p206 = scmp.lt.s32.totalorder %s201, 31
        %s207 = scalar_select %p206, %s201, 31
        %s208 = smul.addr %s207, 8
        %s209 = scalar_lea.vmem %s0, %s208
        %s210 = smul.u32 15, %s19
        %s211 = ssub.s32 32, %s210
        %p212 = scmp.lt.s32.totalorder %s211, 15
        %s213 = scalar_select %p212, %s211, 15
        %s214 = smul.u32 8, %s213
        %s215 = smul.u32 15, %s19
        %s216 = ssub.s32 32, %s215
        %p217 = scmp.lt.s32.totalorder %s216, 15
        %s218 = scalar_select %p217, %s216, 15
        %s219 = smul.u32 8, %s218
        %s220 = smul.u32 %s219, 8
        %s221 = smul.u32 15, %s19
        %s222 = ssub.s32 32, %s221
        %p223 = scmp.lt.s32.totalorder %s222, 15
        %s224 = scalar_select %p223, %s222, 15
        %s225 = smul.u32 8, %s224
        %s226 = smul.u32 %s225, 8
        %v227 = vld [vmem:[%s209] sm:$0xff]
        %v228 = vld [vmem:[%s209 + $0x8] sm:$0xff]
        %v229 = vld [vmem:[%s209 + $0x10] sm:$0xff]
        %v230 = vld [vmem:[%s209 + $0x18] sm:$0xff]
        %v231 = vld [vmem:[%s209 + $0x20] sm:$0xff]
        %v232 = vld [vmem:[%s209 + $0x28] sm:$0xff]
        %v233 = vld [vmem:[%s209 + $0x30] sm:$0xff]
        %v234 = vld [vmem:[%s209 + $0x38] sm:$0xff]
        %v235 = vld [vmem:[%s209 + $0x40] sm:$0xff]
        %v236 = vld [vmem:[%s209 + $0x48] sm:$0xff]
        %v237 = vld [vmem:[%s209 + $0x50] sm:$0xff]
        %v238 = vld [vmem:[%s209 + $0x58] sm:$0xff]
        %v239 = vld [vmem:[%s209 + $0x60] sm:$0xff]
        %v240 = vld [vmem:[%s209 + $0x68] sm:$0xff]
        %v241 = vld [vmem:[%s209 + $0x70] sm:$0xff]
        %v242 = vld [vmem:[%s170] sm:$0xff]
        %v243 = vld [vmem:[%s170 + $0x8] sm:$0xff]
        %v244 = vld [vmem:[%s170 + $0x10] sm:$0xff]
        %v245 = vld [vmem:[%s170 + $0x18] sm:$0xff]
        %v246 = vld [vmem:[%s170 + $0x20] sm:$0xff]
        %v247 = vld [vmem:[%s170 + $0x28] sm:$0xff]
        %v248 = vld [vmem:[%s170 + $0x30] sm:$0xff]
        %v249 = vld [vmem:[%s170 + $0x38] sm:$0xff]
        %v250 = vld [vmem:[%s170 + $0x40] sm:$0xff]
        %v251 = vld [vmem:[%s170 + $0x48] sm:$0xff]
        %v252 = vld [vmem:[%s170 + $0x50] sm:$0xff]
        %v253 = vld [vmem:[%s170 + $0x58] sm:$0xff]
        %v254 = vld [vmem:[%s170 + $0x60] sm:$0xff]
        %v255 = vld [vmem:[%s170 + $0x68] sm:$0xff]
        %v256 = vld [vmem:[%s170 + $0x70] sm:$0xff]
        %v257 = vld [vmem:[%s170 + $0x78] sm:$0xff]
        %v258 = vld [vmem:[%s170 + $0x80] sm:$0xff]
        %v259 = vld [vmem:[%s170 + $0x88] sm:$0xff]
        %v260 = vld [vmem:[%s170 + $0x90] sm:$0xff]
        %v261 = vld [vmem:[%s170 + $0x98] sm:$0xff]
        %v262 = vld [vmem:[%s170 + $0xa0] sm:$0xff]
        %v263 = vld [vmem:[%s170 + $0xa8] sm:$0xff]
        %v264 = vld [vmem:[%s170 + $0xb0] sm:$0xff]
        %v265 = vld [vmem:[%s170 + $0xb8] sm:$0xff]
        %v266 = vld [vmem:[%s170 + $0xc0] sm:$0xff]
        %v267 = vld [vmem:[%s170 + $0xc8] sm:$0xff]
        %v268 = vld [vmem:[%s170 + $0xd0] sm:$0xff]
        %v269 = vld [vmem:[%s170 + $0xd8] sm:$0xff]
        %v270 = vld [vmem:[%s170 + $0xe0] sm:$0xff]
        %v271 = vld [vmem:[%s170 + $0xe8] sm:$0xff]
        %v272 = vld [vmem:[%s170 + $0xf0] sm:$0xff]
        %v273 = vld [vmem:[%s170 + $0xf8] sm:$0xff]
        %v274 = vld [vmem:[%s170 + $0x100] sm:$0xff]
        %v275 = vld [vmem:[%s170 + $0x108] sm:$0xff]
        %v276 = vld [vmem:[%s170 + $0x110] sm:$0xff]
        %v277 = vld [vmem:[%s170 + $0x118] sm:$0xff]
        %v278 = vld [vmem:[%s170 + $0x120] sm:$0xff]
        %v279 = vld [vmem:[%s170 + $0x128] sm:$0xff]
        %v280 = vld [vmem:[%s170 + $0x130] sm:$0xff]
        %v281 = vld [vmem:[%s170 + $0x138] sm:$0xff]
        %v282 = vld [vmem:[%s170 + $0x140] sm:$0xff]
        %v283 = vld [vmem:[%s170 + $0x148] sm:$0xff]
        %v284 = vld [vmem:[%s170 + $0x150] sm:$0xff]
        %v285 = vld [vmem:[%s170 + $0x158] sm:$0xff]
        %v286 = vld [vmem:[%s170 + $0x160] sm:$0xff]
        %v287 = vld [vmem:[%s170 + $0x168] sm:$0xff]
        %v288 = vld [vmem:[%s170 + $0x170] sm:$0xff]
        %v289 = vld [vmem:[%s170 + $0x178] sm:$0xff]
        %v290 = vld [vmem:[%s170 + $0x180] sm:$0xff]
        %v291 = vld [vmem:[%s170 + $0x188] sm:$0xff]
        %v292 = vld [vmem:[%s170 + $0x190] sm:$0xff]
        %v293 = vld [vmem:[%s170 + $0x198] sm:$0xff]
        %v294 = vld [vmem:[%s170 + $0x1a0] sm:$0xff]
        %v295 = vld [vmem:[%s170 + $0x1a8] sm:$0xff]
        %v296 = vld [vmem:[%s170 + $0x1b0] sm:$0xff]
        %v297 = vld [vmem:[%s170 + $0x1b8] sm:$0xff]
        %v298 = vld [vmem:[%s170 + $0x1c0] sm:$0xff]
        %v299 = vld [vmem:[%s170 + $0x1c8] sm:$0xff]
        %v300 = vld [vmem:[%s170 + $0x1d0] sm:$0xff]
        %v301 = vld [vmem:[%s170 + $0x1d8] sm:$0xff]
        %v302 = vld [vmem:[%s170 + $0x1e0] sm:$0xff]
        %v303 = vld [vmem:[%s170 + $0x1e8] sm:$0xff]
        %v304 = vld [vmem:[%s170 + $0x1f0] sm:$0xff]
        %v305 = vld [vmem:[%s170 + $0x1f8] sm:$0xff]
        %v306 = vld [vmem:[%s170 + $0x200] sm:$0xff]
        %v307 = vld [vmem:[%s170 + $0x208] sm:$0xff]
        %v308 = vld [vmem:[%s170 + $0x210] sm:$0xff]
        %v309 = vld [vmem:[%s170 + $0x218] sm:$0xff]
        %v310 = vld [vmem:[%s170 + $0x220] sm:$0xff]
        %v311 = vld [vmem:[%s170 + $0x228] sm:$0xff]
        %v312 = vld [vmem:[%s170 + $0x230] sm:$0xff]
        %v313 = vld [vmem:[%s170 + $0x238] sm:$0xff]
        %v314 = vld [vmem:[%s170 + $0x240] sm:$0xff]
        %v315 = vld [vmem:[%s170 + $0x248] sm:$0xff]
        %v316 = vld [vmem:[%s170 + $0x250] sm:$0xff]
        %v317 = vld [vmem:[%s170 + $0x258] sm:$0xff]
        %v318 = vld [vmem:[%s170 + $0x260] sm:$0xff]
        %v319 = vld [vmem:[%s170 + $0x268] sm:$0xff]
        %v320 = vld [vmem:[%s170 + $0x270] sm:$0xff]
        %v321 = vld [vmem:[%s170 + $0x278] sm:$0xff]
        %v322 = vld [vmem:[%s170 + $0x280] sm:$0xff]
        %v323 = vld [vmem:[%s170 + $0x288] sm:$0xff]
        %v324 = vld [vmem:[%s170 + $0x290] sm:$0xff]
        %v325 = vld [vmem:[%s170 + $0x298] sm:$0xff]
        %v326 = vld [vmem:[%s170 + $0x2a0] sm:$0xff]
        %v327 = vld [vmem:[%s170 + $0x2a8] sm:$0xff]
        %v328 = vld [vmem:[%s170 + $0x2b0] sm:$0xff]
        %v329 = vld [vmem:[%s170 + $0x2b8] sm:$0xff]
        %v330 = vld [vmem:[%s170 + $0x2c0] sm:$0xff]
        %v331 = vld [vmem:[%s170 + $0x2c8] sm:$0xff]
        %v332 = vld [vmem:[%s170 + $0x2d0] sm:$0xff]
        %v333 = vld [vmem:[%s170 + $0x2d8] sm:$0xff]
        %v334 = vld [vmem:[%s170 + $0x2e0] sm:$0xff]
        %v335 = vld [vmem:[%s170 + $0x2e8] sm:$0xff]
        %v336 = vld [vmem:[%s170 + $0x2f0] sm:$0xff]
        %v337 = vld [vmem:[%s170 + $0x2f8] sm:$0xff]
        %v338 = vld [vmem:[%s170 + $0x300] sm:$0xff]
        %v339 = vld [vmem:[%s170 + $0x308] sm:$0xff]
        %v340 = vld [vmem:[%s170 + $0x310] sm:$0xff]
        %v341 = vld [vmem:[%s170 + $0x318] sm:$0xff]
        %v342 = vld [vmem:[%s170 + $0x320] sm:$0xff]
        %v343 = vld [vmem:[%s170 + $0x328] sm:$0xff]
        %v344 = vld [vmem:[%s170 + $0x330] sm:$0xff]
        %v345 = vld [vmem:[%s170 + $0x338] sm:$0xff]
        %v346 = vld [vmem:[%s170 + $0x340] sm:$0xff]
        %v347 = vld [vmem:[%s170 + $0x348] sm:$0xff]
        %v348 = vld [vmem:[%s170 + $0x350] sm:$0xff]
        %v349 = vld [vmem:[%s170 + $0x358] sm:$0xff]
        %v350 = vld [vmem:[%s170 + $0x360] sm:$0xff]
        %v351 = vld [vmem:[%s170 + $0x368] sm:$0xff]
        %v352 = vld [vmem:[%s170 + $0x370] sm:$0xff]
        %v353 = vld [vmem:[%s170 + $0x378] sm:$0xff]
        %v354 = vld [vmem:[%s170 + $0x380] sm:$0xff]
        %v355 = vld [vmem:[%s170 + $0x388] sm:$0xff]
        %v356 = vld [vmem:[%s170 + $0x390] sm:$0xff]
        %v357 = vld [vmem:[%s170 + $0x398] sm:$0xff]
        %v358 = vld [vmem:[%s170 + $0x3a0] sm:$0xff]
        %v359 = vld [vmem:[%s170 + $0x3a8] sm:$0xff]
        %v360 = vld [vmem:[%s170 + $0x3b0] sm:$0xff]
        %v361 = vld [vmem:[%s170 + $0x3b8] sm:$0xff]
        %363 = vset.pattern.permute.xlu0 0
        %364 = vperm.xlu0 %363, %v227
        %v365 = vpop.permute.xlu0 %364
        %368 = vset.pattern.permute.xlu0 0
        %369 = vperm.xlu0 %368, %v228
        %v370 = vpop.permute.xlu0 %369
        %373 = vset.pattern.permute.xlu0 0
        %374 = vperm.xlu0 %373, %v229
        %v375 = vpop.permute.xlu0 %374
        %378 = vset.pattern.permute.xlu0 0
        %379 = vperm.xlu0 %378, %v230
        %v380 = vpop.permute.xlu0 %379
        %383 = vset.pattern.permute.xlu0 0
        %384 = vperm.xlu0 %383, %v231
        %v385 = vpop.permute.xlu0 %384
        %388 = vset.pattern.permute.xlu0 0
        %389 = vperm.xlu0 %388, %v232
        %v390 = vpop.permute.xlu0 %389
        %393 = vset.pattern.permute.xlu0 0
        %394 = vperm.xlu0 %393, %v233
        %v395 = vpop.permute.xlu0 %394
        %398 = vset.pattern.permute.xlu0 0
        %399 = vperm.xlu0 %398, %v234
        %v400 = vpop.permute.xlu0 %399
        %403 = vset.pattern.permute.xlu0 0
        %404 = vperm.xlu0 %403, %v235
        %v405 = vpop.permute.xlu0 %404
        %408 = vset.pattern.permute.xlu0 0
        %409 = vperm.xlu0 %408, %v236
        %v410 = vpop.permute.xlu0 %409
        %413 = vset.pattern.permute.xlu0 0
        %414 = vperm.xlu0 %413, %v237
        %v415 = vpop.permute.xlu0 %414
        %418 = vset.pattern.permute.xlu0 0
        %419 = vperm.xlu0 %418, %v238
        %v420 = vpop.permute.xlu0 %419
        %423 = vset.pattern.permute.xlu0 0
        %424 = vperm.xlu0 %423, %v239
        %v425 = vpop.permute.xlu0 %424
        %428 = vset.pattern.permute.xlu0 0
        %429 = vperm.xlu0 %428, %v240
        %v430 = vpop.permute.xlu0 %429
        %433 = vset.pattern.permute.xlu0 0
        %434 = vperm.xlu0 %433, %v241
        %v435 = vpop.permute.xlu0 %434
        %v437 = vmul.f32 %v365, %v242
        %v438 = vmul.f32 %v365, %v243
        %v439 = vmul.f32 %v365, %v244
        %v440 = vmul.f32 %v365, %v245
        %v441 = vmul.f32 %v365, %v246
        %v442 = vmul.f32 %v365, %v247
        %v443 = vmul.f32 %v365, %v248
        %v444 = vmul.f32 %v365, %v249
        %v445 = vmul.f32 %v370, %v250
        %v446 = vmul.f32 %v370, %v251
        %v447 = vmul.f32 %v370, %v252
        %v448 = vmul.f32 %v370, %v253
        %v449 = vmul.f32 %v370, %v254
        %v450 = vmul.f32 %v370, %v255
        %v451 = vmul.f32 %v370, %v256
        %v452 = vmul.f32 %v370, %v257
        %v453 = vmul.f32 %v375, %v258
        %v454 = vmul.f32 %v375, %v259
        %v455 = vmul.f32 %v375, %v260
        %v456 = vmul.f32 %v375, %v261
        %v457 = vmul.f32 %v375, %v262
        %v458 = vmul.f32 %v375, %v263
        %v459 = vmul.f32 %v375, %v264
        %v460 = vmul.f32 %v375, %v265
        %v461 = vmul.f32 %v380, %v266
        %v462 = vmul.f32 %v380, %v267
        %v463 = vmul.f32 %v380, %v268
        %v464 = vmul.f32 %v380, %v269
        %v465 = vmul.f32 %v380, %v270
        %v466 = vmul.f32 %v380, %v271
        %v467 = vmul.f32 %v380, %v272
        %v468 = vmul.f32 %v380, %v273
        %v469 = vmul.f32 %v385, %v274
        %v470 = vmul.f32 %v385, %v275
        %v471 = vmul.f32 %v385, %v276
        %v472 = vmul.f32 %v385, %v277
        %v473 = vmul.f32 %v385, %v278
        %v474 = vmul.f32 %v385, %v279
        %v475 = vmul.f32 %v385, %v280
        %v476 = vmul.f32 %v385, %v281
        %v477 = vmul.f32 %v390, %v282
        %v478 = vmul.f32 %v390, %v283
        %v479 = vmul.f32 %v390, %v284
        %v480 = vmul.f32 %v390, %v285
        %v481 = vmul.f32 %v390, %v286
        %v482 = vmul.f32 %v390, %v287
        %v483 = vmul.f32 %v390, %v288
        %v484 = vmul.f32 %v390, %v289
        %v485 = vmul.f32 %v395, %v290
        %v486 = vmul.f32 %v395, %v291
        %v487 = vmul.f32 %v395, %v292
        %v488 = vmul.f32 %v395, %v293
        %v489 = vmul.f32 %v395, %v294
        %v490 = vmul.f32 %v395, %v295
        %v491 = vmul.f32 %v395, %v296
        %v492 = vmul.f32 %v395, %v297
        %v493 = vmul.f32 %v400, %v298
        %v494 = vmul.f32 %v400, %v299
        %v495 = vmul.f32 %v400, %v300
        %v496 = vmul.f32 %v400, %v301
        %v497 = vmul.f32 %v400, %v302
        %v498 = vmul.f32 %v400, %v303
        %v499 = vmul.f32 %v400, %v304
        %v500 = vmul.f32 %v400, %v305
        %v501 = vmul.f32 %v405, %v306
        %v502 = vmul.f32 %v405, %v307
        %v503 = vmul.f32 %v405, %v308
        %v504 = vmul.f32 %v405, %v309
        %v505 = vmul.f32 %v405, %v310
        %v506 = vmul.f32 %v405, %v311
        %v507 = vmul.f32 %v405, %v312
        %v508 = vmul.f32 %v405, %v313
        %v509 = vmul.f32 %v410, %v314
        %v510 = vmul.f32 %v410, %v315
        %v511 = vmul.f32 %v410, %v316
        %v512 = vmul.f32 %v410, %v317
        %v513 = vmul.f32 %v410, %v318
        %v514 = vmul.f32 %v410, %v319
        %v515 = vmul.f32 %v410, %v320
        %v516 = vmul.f32 %v410, %v321
        %v517 = vmul.f32 %v415, %v322
        %v518 = vmul.f32 %v415, %v323
        %v519 = vmul.f32 %v415, %v324
        %v520 = vmul.f32 %v415, %v325
        %v521 = vmul.f32 %v415, %v326
        %v522 = vmul.f32 %v415, %v327
        %v523 = vmul.f32 %v415, %v328
        %v524 = vmul.f32 %v415, %v329
        %v525 = vmul.f32 %v420, %v330
        %v526 = vmul.f32 %v420, %v331
        %v527 = vmul.f32 %v420, %v332
        %v528 = vmul.f32 %v420, %v333
        %v529 = vmul.f32 %v420, %v334
        %v530 = vmul.f32 %v420, %v335
        %v531 = vmul.f32 %v420, %v336
        %v532 = vmul.f32 %v420, %v337
        %v533 = vmul.f32 %v425, %v338
        %v534 = vmul.f32 %v425, %v339
        %v535 = vmul.f32 %v425, %v340
        %v536 = vmul.f32 %v425, %v341
        %v537 = vmul.f32 %v425, %v342
        %v538 = vmul.f32 %v425, %v343
        %v539 = vmul.f32 %v425, %v344
        %v540 = vmul.f32 %v425, %v345
        %v541 = vmul.f32 %v430, %v346
        %v542 = vmul.f32 %v430, %v347
        %v543 = vmul.f32 %v430, %v348
        %v544 = vmul.f32 %v430, %v349
        %v545 = vmul.f32 %v430, %v350
        %v546 = vmul.f32 %v430, %v351
        %v547 = vmul.f32 %v430, %v352
        %v548 = vmul.f32 %v430, %v353
        %v549 = vmul.f32 %v435, %v354
        %v550 = vmul.f32 %v435, %v355
        %v551 = vmul.f32 %v435, %v356
        %v552 = vmul.f32 %v435, %v357
        %v553 = vmul.f32 %v435, %v358
        %v554 = vmul.f32 %v435, %v359
        %v555 = vmul.f32 %v435, %v360
        %v556 = vmul.f32 %v435, %v361
        %557 = vst [vmem:[%s200] sm:$0xff] %v437
        %558 = vst [vmem:[%s200 + $0x8] sm:$0xff] %v438
        %559 = vst [vmem:[%s200 + $0x10] sm:$0xff] %v439
        %560 = vst [vmem:[%s200 + $0x18] sm:$0xff] %v440
        %561 = vst [vmem:[%s200 + $0x20] sm:$0xff] %v441
        %562 = vst [vmem:[%s200 + $0x28] sm:$0xff] %v442
        %563 = vst [vmem:[%s200 + $0x30] sm:$0xff] %v443
        %564 = vst [vmem:[%s200 + $0x38] sm:$0xff] %v444
        %565 = vst [vmem:[%s200 + $0x40] sm:$0xff] %v445
        %566 = vst [vmem:[%s200 + $0x48] sm:$0xff] %v446
        %567 = vst [vmem:[%s200 + $0x50] sm:$0xff] %v447
        %568 = vst [vmem:[%s200 + $0x58] sm:$0xff] %v448
        %569 = vst [vmem:[%s200 + $0x60] sm:$0xff] %v449
        %570 = vst [vmem:[%s200 + $0x68] sm:$0xff] %v450
        %571 = vst [vmem:[%s200 + $0x70] sm:$0xff] %v451
        %572 = vst [vmem:[%s200 + $0x78] sm:$0xff] %v452
        %573 = vst [vmem:[%s200 + $0x80] sm:$0xff] %v453
        %574 = vst [vmem:[%s200 + $0x88] sm:$0xff] %v454
        %575 = vst [vmem:[%s200 + $0x90] sm:$0xff] %v455
        %576 = vst [vmem:[%s200 + $0x98] sm:$0xff] %v456
        %577 = vst [vmem:[%s200 + $0xa0] sm:$0xff] %v457
        %578 = vst [vmem:[%s200 + $0xa8] sm:$0xff] %v458
        %579 = vst [vmem:[%s200 + $0xb0] sm:$0xff] %v459
        %580 = vst [vmem:[%s200 + $0xb8] sm:$0xff] %v460
        %581 = vst [vmem:[%s200 + $0xc0] sm:$0xff] %v461
        %582 = vst [vmem:[%s200 + $0xc8] sm:$0xff] %v462
        %583 = vst [vmem:[%s200 + $0xd0] sm:$0xff] %v463
        %584 = vst [vmem:[%s200 + $0xd8] sm:$0xff] %v464
        %585 = vst [vmem:[%s200 + $0xe0] sm:$0xff] %v465
        %586 = vst [vmem:[%s200 + $0xe8] sm:$0xff] %v466
        %587 = vst [vmem:[%s200 + $0xf0] sm:$0xff] %v467
        %588 = vst [vmem:[%s200 + $0xf8] sm:$0xff] %v468
        %589 = vst [vmem:[%s200 + $0x100] sm:$0xff] %v469
        %590 = vst [vmem:[%s200 + $0x108] sm:$0xff] %v470
        %591 = vst [vmem:[%s200 + $0x110] sm:$0xff] %v471
        %592 = vst [vmem:[%s200 + $0x118] sm:$0xff] %v472
        %593 = vst [vmem:[%s200 + $0x120] sm:$0xff] %v473
        %594 = vst [vmem:[%s200 + $0x128] sm:$0xff] %v474
        %595 = vst [vmem:[%s200 + $0x130] sm:$0xff] %v475
        %596 = vst [vmem:[%s200 + $0x138] sm:$0xff] %v476
        %597 = vst [vmem:[%s200 + $0x140] sm:$0xff] %v477
        %598 = vst [vmem:[%s200 + $0x148] sm:$0xff] %v478
        %599 = vst [vmem:[%s200 + $0x150] sm:$0xff] %v479
        %600 = vst [vmem:[%s200 + $0x158] sm:$0xff] %v480
        %601 = vst [vmem:[%s200 + $0x160] sm:$0xff] %v481
        %602 = vst [vmem:[%s200 + $0x168] sm:$0xff] %v482
        %603 = vst [vmem:[%s200 + $0x170] sm:$0xff] %v483
        %604 = vst [vmem:[%s200 + $0x178] sm:$0xff] %v484
        %605 = vst [vmem:[%s200 + $0x180] sm:$0xff] %v485
        %606 = vst [vmem:[%s200 + $0x188] sm:$0xff] %v486
        %607 = vst [vmem:[%s200 + $0x190] sm:$0xff] %v487
        %608 = vst [vmem:[%s200 + $0x198] sm:$0xff] %v488
        %609 = vst [vmem:[%s200 + $0x1a0] sm:$0xff] %v489
        %610 = vst [vmem:[%s200 + $0x1a8] sm:$0xff] %v490
        %611 = vst [vmem:[%s200 + $0x1b0] sm:$0xff] %v491
        %612 = vst [vmem:[%s200 + $0x1b8] sm:$0xff] %v492
        %613 = vst [vmem:[%s200 + $0x1c0] sm:$0xff] %v493
        %614 = vst [vmem:[%s200 + $0x1c8] sm:$0xff] %v494
        %615 = vst [vmem:[%s200 + $0x1d0] sm:$0xff] %v495
        %616 = vst [vmem:[%s200 + $0x1d8] sm:$0xff] %v496
        %617 = vst [vmem:[%s200 + $0x1e0] sm:$0xff] %v497
        %618 = vst [vmem:[%s200 + $0x1e8] sm:$0xff] %v498
        %619 = vst [vmem:[%s200 + $0x1f0] sm:$0xff] %v499
        %620 = vst [vmem:[%s200 + $0x1f8] sm:$0xff] %v500
        %621 = vst [vmem:[%s200 + $0x200] sm:$0xff] %v501
        %622 = vst [vmem:[%s200 + $0x208] sm:$0xff] %v502
        %623 = vst [vmem:[%s200 + $0x210] sm:$0xff] %v503
        %624 = vst [vmem:[%s200 + $0x218] sm:$0xff] %v504
        %625 = vst [vmem:[%s200 + $0x220] sm:$0xff] %v505
        %626 = vst [vmem:[%s200 + $0x228] sm:$0xff] %v506
        %627 = vst [vmem:[%s200 + $0x230] sm:$0xff] %v507
        %628 = vst [vmem:[%s200 + $0x238] sm:$0xff] %v508
        %629 = vst [vmem:[%s200 + $0x240] sm:$0xff] %v509
        %630 = vst [vmem:[%s200 + $0x248] sm:$0xff] %v510
        %631 = vst [vmem:[%s200 + $0x250] sm:$0xff] %v511
        %632 = vst [vmem:[%s200 + $0x258] sm:$0xff] %v512
        %633 = vst [vmem:[%s200 + $0x260] sm:$0xff] %v513
        %634 = vst [vmem:[%s200 + $0x268] sm:$0xff] %v514
        %635 = vst [vmem:[%s200 + $0x270] sm:$0xff] %v515
        %636 = vst [vmem:[%s200 + $0x278] sm:$0xff] %v516
        %637 = vst [vmem:[%s200 + $0x280] sm:$0xff] %v517
        %638 = vst [vmem:[%s200 + $0x288] sm:$0xff] %v518
        %639 = vst [vmem:[%s200 + $0x290] sm:$0xff] %v519
        %640 = vst [vmem:[%s200 + $0x298] sm:$0xff] %v520
        %641 = vst [vmem:[%s200 + $0x2a0] sm:$0xff] %v521
        %642 = vst [vmem:[%s200 + $0x2a8] sm:$0xff] %v522
        %643 = vst [vmem:[%s200 + $0x2b0] sm:$0xff] %v523
        %644 = vst [vmem:[%s200 + $0x2b8] sm:$0xff] %v524
        %645 = vst [vmem:[%s200 + $0x2c0] sm:$0xff] %v525
        %646 = vst [vmem:[%s200 + $0x2c8] sm:$0xff] %v526
        %647 = vst [vmem:[%s200 + $0x2d0] sm:$0xff] %v527
        %648 = vst [vmem:[%s200 + $0x2d8] sm:$0xff] %v528
        %649 = vst [vmem:[%s200 + $0x2e0] sm:$0xff] %v529
        %650 = vst [vmem:[%s200 + $0x2e8] sm:$0xff] %v530
        %651 = vst [vmem:[%s200 + $0x2f0] sm:$0xff] %v531
        %652 = vst [vmem:[%s200 + $0x2f8] sm:$0xff] %v532
        %653 = vst [vmem:[%s200 + $0x300] sm:$0xff] %v533
        %654 = vst [vmem:[%s200 + $0x308] sm:$0xff] %v534
        %655 = vst [vmem:[%s200 + $0x310] sm:$0xff] %v535
        %656 = vst [vmem:[%s200 + $0x318] sm:$0xff] %v536
        %657 = vst [vmem:[%s200 + $0x320] sm:$0xff] %v537
        %658 = vst [vmem:[%s200 + $0x328] sm:$0xff] %v538
        %659 = vst [vmem:[%s200 + $0x330] sm:$0xff] %v539
        %660 = vst [vmem:[%s200 + $0x338] sm:$0xff] %v540
        %661 = vst [vmem:[%s200 + $0x340] sm:$0xff] %v541
        %662 = vst [vmem:[%s200 + $0x348] sm:$0xff] %v542
        %663 = vst [vmem:[%s200 + $0x350] sm:$0xff] %v543
        %664 = vst [vmem:[%s200 + $0x358] sm:$0xff] %v544
        %665 = vst [vmem:[%s200 + $0x360] sm:$0xff] %v545
        %666 = vst [vmem:[%s200 + $0x368] sm:$0xff] %v546
        %667 = vst [vmem:[%s200 + $0x370] sm:$0xff] %v547
        %668 = vst [vmem:[%s200 + $0x378] sm:$0xff] %v548
        %669 = vst [vmem:[%s200 + $0x380] sm:$0xff] %v549
        %670 = vst [vmem:[%s200 + $0x388] sm:$0xff] %v550
        %671 = vst [vmem:[%s200 + $0x390] sm:$0xff] %v551
        %672 = vst [vmem:[%s200 + $0x398] sm:$0xff] %v552
        %673 = vst [vmem:[%s200 + $0x3a0] sm:$0xff] %v553
        %674 = vst [vmem:[%s200 + $0x3a8] sm:$0xff] %v554
        %675 = vst [vmem:[%s200 + $0x3b0] sm:$0xff] %v555
        %676 = vst [vmem:[%s200 + $0x3b8] sm:$0xff] %v556
        %s677 = sand.u32 %s79, 1
        %s678 = scalar_lea.sflag [#allocation4], %s677
        %s679 = sand.u32 %s79, 1
        %s680 = smul.addr %s679, 960
        %s681 = scalar_lea.vmem [#allocation5], %s680
        // Predicated region
        $region33: #{tpu_custom_call.1} parent=27 // pred_check
          %p682 = pneg %p89
        $region34: #{tpu_custom_call.1} parent=27 // pred_check_branch
          %684 = sbr.rel (%p682) target = $region36
        $region35: #{tpu_custom_call.1} parent=27 // pred_region
          %s685 = smul.u32 15, %s19
          %s686 = ssub.s32 32, %s685
          %p687 = scmp.lt.s32.totalorder %s686, 15
          %s688 = scalar_select %p687, %s686, 15
          %s689 = smul.u32 8, %s688
          %s690 = smul.u32 %s689, 8
          %s691 = ssub.s32 960, %s690
          %s692 = sshll.u32 %s691, 4
          %693 = vsyncadd %s678, %s692
          %p694 = scmp.ne.s32.totalorder 0, %s690
          %s695 = smul.addr %s685, 8
          %s696 = smul.addr %s695, 8
          %s697 = scalar_lea.hbm %s2, %s696
          %s698 = smul.u32 64, %s688
          %s699 = sshll.u32 %s681, 4
          %s700 = int_to_ptr.vmem [resolvable:$true] %s699
          %s701 = sshll.u32 %s697, 4
          %s702 = int_to_ptr.hbm [resolvable:$true] %s701
          %s703 = sshll.u32 %s698, 4
          %707 = dma.vmem_to_hbm [thread:$0]  (%p694), %s700, %s703, %s702, %s678, 1024, 1024, 64
        $region36: #{tpu_custom_call.1} parent=27 // pred_fallthru
          _
      $region28: #{tpu_custom_call.1} parent=5 // pred_fallthru
        _
      %p708 = scmp.le.s32.totalorder 2, %s14
      // Predicated region
      $region37: #{tpu_custom_call.1} parent=5 // pred_check
        %p709 = pneg %p708
      $region38: #{tpu_custom_call.1} parent=5 // pred_check_branch
        %711 = sbr.rel (%p709) target = $region40
      $region39: #{tpu_custom_call.1} parent=5 // pred_region
        %s712 = ssub.s32 %s14, 2
        // Predicated region
        $region41: #{tpu_custom_call.1} parent=39 // pred_check
          %p713 = pneg %p95
        $region42: #{tpu_custom_call.1} parent=39 // pred_check_branch
          %715 = sbr.rel (%p713) target = $region44
        $region43: #{tpu_custom_call.1} parent=39 // pred_region
          %s716 = sand.u32 %s80, 1
          %s717 = scalar_lea.sflag [#allocation4], %s716
          %s718 = sand.u32 %s80, 1
          %s719 = smul.addr %s718, 960
          %s720 = scalar_lea.vmem [#allocation5], %s719
          %722 = dma.done %s717, 15360
        $region44: #{tpu_custom_call.1} parent=39 // pred_fallthru
          _
      $region40: #{tpu_custom_call.1} parent=5 // pred_fallthru
        _
    $region6: #{tpu_custom_call.1} parent=1 // loop_footer
      %s18 = sadd.s32 1, %s14
    $region7: #{tpu_custom_call.1} parent=1 // loop_footer_branch
      %13 = sbr.rel target = $region3
    $region8: #{tpu_custom_call.1} parent=1 // loop_exit
      _
    %723 = vsyncpa [#allocation3], 1
    %s724 = scalar_lea.sflag [#allocation3], 1
    %725 = vsyncpa %s724, 1
    %726 = vsyncpa [#allocation4], 1
    %s727 = scalar_lea.sflag [#allocation4], 1
    %728 = vsyncpa %s727, 1

</llo_original>
